<compile_context>
chip_gen: v7x
topology: tpu7x:2x2x1
jax: 0.10.0
libtpu: 0.0.40
codegen_flags: <defaults>
</compile_context>

<pallas_src>
import math

import jax
import jax.numpy as jnp
from jax import lax
from jax.experimental import pallas as pl
from jax.experimental.pallas import tpu as pltpu

H1, H2 = 200, 100          # hidden sizes from NetworkDropout.__init__
DROP_P = 0.1               # dropout prob from NetworkDropout.__init__
_KEEP_P = 1.0 - DROP_P
# keep iff hash_bits (uint32) < keep_p * 2^32   (guard against keep_p == 1.0)
_KEEP_THR = min(int(_KEEP_P * (2 ** 32)), 2 ** 32 - 1)


def _round_up(x, m):
    return ((x + m - 1) // m) * m


def _dropout_bits(seed_u32, salt, row0_i32, shape):
    """Deterministic per-element uint32 hash (murmur-style finalizer)."""
    r = (lax.broadcasted_iota(jnp.int32, shape, 0) + row0_i32).astype(jnp.uint32)
    c = lax.broadcasted_iota(jnp.int32, shape, 1).astype(jnp.uint32)
    x = seed_u32 + jnp.uint32(salt)
    x = x ^ (r * jnp.uint32(0x9E3779B1)) ^ (c * jnp.uint32(0x85EBCA77))
    x = x ^ (x >> 16)
    x = x * jnp.uint32(0x7FEB352D)
    x = x ^ (x >> 15)
    x = x * jnp.uint32(0x846CA68B)
    x = x ^ (x >> 16)
    return x


def mlp_dropout_kernel(seed_ref,                        # scalar-prefetch (SMEM)
                       x_ref, w1_ref, b1_ref,
                       w2_ref, b2_ref, w3_ref, b3_ref,  # inputs (VMEM)
                       o_ref):                          # output (VMEM)
    seed_u32 = seed_ref[0].astype(jnp.uint32)
    tb = o_ref.shape[0]
    row0 = pl.program_id(0) * tb                        # global row of this tile

    inv_keep = jnp.float32(1.0 / _KEEP_P)
    thr = jnp.uint32(_KEEP_THR)

    def dropout(h, salt):
        bits = _dropout_bits(seed_u32, salt, row0, h.shape)
        return jnp.where(bits < thr, h * inv_keep, jnp.float32(0.0))

    # ---- layer 1: Linear + ReLU + Dropout (bf16 MXU, f32 accum) ----
    h = jnp.dot(x_ref[...], w1_ref[...],
                preferred_element_type=jnp.float32) + b1_ref[...]
    h = jnp.maximum(h, 0.0)
    h = dropout(h, 0x1234_5678)

    # ---- layer 2: Linear + ReLU + Dropout ----
    h = jnp.dot(h.astype(jnp.bfloat16), w2_ref[...],
                preferred_element_type=jnp.float32) + b2_ref[...]
    h = jnp.maximum(h, 0.0)
    h = dropout(h, 0x0BAD_CAFE)

    # ---- layer 3: Linear (no activation) ----
    out = jnp.dot(h.astype(jnp.bfloat16), w3_ref[...],
                  preferred_element_type=jnp.float32) + b3_ref[...]
    o_ref[...] = out.astype(o_ref.dtype)


def network_dropout_forward(x, w1, b1, w2, b2, w3, b3, seed):
    """Pallas TPU forward of NetworkDropout (training-mode dropout).

    x:  (B, input_dim) float32
    wN: (in, out) float32   (transposed vs. PyTorch's (out, in))
    bN: (1, out)  float32
    """
    B, D = x.shape
    d_out = w3.shape[1]

    # Padded (lane-dense) dims.
    Dp = _round_up(D, 128)
    H1p = _round_up(H1, 128)     # 256
    H2p = _round_up(H2, 128)     # 128
    Op = _round_up(d_out, 128)

    # Batch tile: multiple of 8, capped at 512 (fits comfortably in v7x's
    # 64 MiB VMEM with double buffering: bf16 x tile + f32 out tile < 0.5 MiB).
    TB = min(512, _round_up(B, 8))
    Bp = _round_up(B, TB)

    f32, bf16 = jnp.float32, jnp.bfloat16
    xp = jnp.zeros((Bp, Dp), bf16).at[:B, :D].set(x.astype(bf16))
    w1p = jnp.zeros((Dp, H1p), bf16).at[:D, :H1].set(w1.astype(bf16))
    b1p = jnp.zeros((1, H1p), f32).at[:, :H1].set(b1)
    w2p = jnp.zeros((H1p, H2p), bf16).at[:H1, :H2].set(w2.astype(bf16))
    b2p = jnp.zeros((1, H2p), f32).at[:, :H2].set(b2)
    w3p = jnp.zeros((H2p, Op), bf16).at[:H2, :d_out].set(w3.astype(bf16))
    b3p = jnp.zeros((1, Op), f32).at[:, :d_out].set(b3)

    seed_arr = jnp.asarray([seed], dtype=jnp.int32)

    grid_spec = pltpu.PrefetchScalarGridSpec(
        num_scalar_prefetch=1,
        grid=(Bp // TB,),
        in_specs=[
            pl.BlockSpec((TB, Dp),    lambda i, s: (i, 0)),   # x: tiled over batch
            pl.BlockSpec((Dp, H1p),   lambda i, s: (0, 0)),   # weights resident
            pl.BlockSpec((1, H1p),    lambda i, s: (0, 0)),
            pl.BlockSpec((H1p, H2p),  lambda i, s: (0, 0)),
            pl.BlockSpec((1, H2p),    lambda i, s: (0, 0)),
            pl.BlockSpec((H2p, Op),   lambda i, s: (0, 0)),
            pl.BlockSpec((1, Op),     lambda i, s: (0, 0)),
        ],
        out_specs=pl.BlockSpec((TB, Op), lambda i, s: (i, 0)),
    )

    out_padded = pl.pallas_call(
        mlp_dropout_kernel,
        out_shape=jax.ShapeDtypeStruct((Bp, Op), jnp.float32),
        grid_spec=grid_spec,
        compiler_params=pltpu.CompilerParams(
            dimension_semantics=("parallel",)),
    )(seed_arr, xp, w1p, b1p, w2p, b2p, w3p, b3p)

    return out_padded[:B, :d_out]


def init_linear(key, fan_in, fan_out):
    """PyTorch nn.Linear-style init: U(-1/sqrt(fan_in), 1/sqrt(fan_in)).
    Weight is produced already transposed to (fan_in, fan_out)."""
    kw, kb = jax.random.split(key)
    bound = 1.0 / math.sqrt(fan_in)
    w = jax.random.uniform(kw, (fan_in, fan_out), jnp.float32, -bound, bound)
    b = jax.random.uniform(kb, (1, fan_out), jnp.float32, -bound, bound)
    return w, b


if __name__ == "__main__":
    input_dim, output_dim = 32, 16
    batch = 8

    root = jax.random.PRNGKey(0)
    kx, k1, k2, k3 = jax.random.split(root, 4)

    x = jax.random.normal(kx, (batch, input_dim), jnp.float32)
    w1, b1 = init_linear(k1, input_dim, H1)
    w2, b2 = init_linear(k2, H1, H2)
    w3, b3 = init_linear(k3, H2, output_dim)

    out = network_dropout_forward(x, w1, b1, w2, b2, w3, b3, seed=1234)
    jax.block_until_ready(out)

    assert out.shape == (batch, output_dim)
    assert out.dtype == jnp.float32
    assert bool(jnp.all(jnp.isfinite(out)))
    print("KERNEL_OK")
</pallas_src>

<mosaic_0001>
module attributes {stable_mosaic.version = 11 : i64} {
  func.func @mlp_dropout_kernel(%arg0: i32, %arg1: memref<1xi32, #tpu.memory_space<smem>>, %arg2: memref<8x128xbf16, #tpu.memory_space<vmem>>, %arg3: memref<128x256xbf16, #tpu.memory_space<vmem>>, %arg4: memref<1x256xf32, #tpu.memory_space<vmem>>, %arg5: memref<256x128xbf16, #tpu.memory_space<vmem>>, %arg6: memref<1x128xf32, #tpu.memory_space<vmem>>, %arg7: memref<128x128xbf16, #tpu.memory_space<vmem>>, %arg8: memref<1x128xf32, #tpu.memory_space<vmem>>, %arg9: memref<8x128xf32, #tpu.memory_space<vmem>>) attributes {dimension_semantics = [#tpu.dimension_semantics<parallel>], iteration_bounds = array<i64: 1>, scalar_prefetch = 1 : i64, scratch_operands = 0 : i64, tpu.core_type = #tpu.core_type<tc>, window_params = [{transform_indices = @transform_0, window_bounds = array<i64: 8, 128>}, {pipeline_mode = #tpu.pipeline_mode<synchronous>, transform_indices = @transform_1, window_bounds = array<i64: 128, 256>}, {pipeline_mode = #tpu.pipeline_mode<synchronous>, transform_indices = @transform_2, window_bounds = array<i64: 1, 256>}, {pipeline_mode = #tpu.pipeline_mode<synchronous>, transform_indices = @transform_3, window_bounds = array<i64: 256, 128>}, {pipeline_mode = #tpu.pipeline_mode<synchronous>, transform_indices = @transform_4, window_bounds = array<i64: 1, 128>}, {pipeline_mode = #tpu.pipeline_mode<synchronous>, transform_indices = @transform_5, window_bounds = array<i64: 128, 128>}, {pipeline_mode = #tpu.pipeline_mode<synchronous>, transform_indices = @transform_6, window_bounds = array<i64: 1, 128>}, {transform_indices = @transform_7, window_bounds = array<i64: 8, 128>}]} {
    %c0 = arith.constant 0 : index
    %0 = memref.load %arg1[%c0] : memref<1xi32, #tpu.memory_space<smem>>
    %c8_i32 = arith.constant 8 : i32
    %1 = arith.muli %arg0, %c8_i32 : i32
    %c0_0 = arith.constant 0 : index
    %c0_1 = arith.constant 0 : index
    %2 = vector.load %arg2[%c0_0, %c0_1] : memref<8x128xbf16, #tpu.memory_space<vmem>>, vector<8x128xbf16>
    %c0_2 = arith.constant 0 : index
    %c0_3 = arith.constant 0 : index
    %3 = vector.load %arg3[%c0_2, %c0_3] : memref<128x256xbf16, #tpu.memory_space<vmem>>, vector<128x256xbf16>
    %cst = arith.constant dense<0.000000e+00> : vector<8x256xf32>
    %4 = tpu.matmul %2, %3, %cst {dimension_numbers = #tpu.dot_dimension_numbers<[1], [0], [0], [1], [0, 0, 1, 1], [], []>} : vector<8x128xbf16>, vector<128x256xbf16>, vector<8x256xf32> -> vector<8x256xf32>
    %c0_4 = arith.constant 0 : index
    %c0_5 = arith.constant 0 : index
    %5 = vector.load %arg4[%c0_4, %c0_5] : memref<1x256xf32, #tpu.memory_space<vmem>>, vector<1x256xf32>
    %6 = vector.broadcast %5 : vector<1x256xf32> to vector<8x256xf32>
    %7 = arith.addf %4, %6 : vector<8x256xf32>
    %cst_6 = arith.constant 0.000000e+00 : f32
    %8 = vector.broadcast %cst_6 : f32 to vector<8x256xf32>
    %9 = arith.maximumf %7, %8 : vector<8x256xf32>
    %10 = tpu.iota {dimensions = array<i32: 0>} : vector<8x256xi32>
    %11 = vector.broadcast %1 : i32 to vector<8x256xi32>
    %12 = arith.addi %10, %11 : vector<8x256xi32>
    %13 = tpu.iota {dimensions = array<i32: 1>} : vector<8x256xi32>
    %c305419896_i32 = arith.constant 305419896 : i32
    %14 = arith.addi %0, %c305419896_i32 : i32
    %c-1640531535_i32 = arith.constant -1640531535 : i32
    %15 = vector.broadcast %c-1640531535_i32 : i32 to vector<8x256xi32>
    %16 = arith.muli %12, %15 : vector<8x256xi32>
    %17 = vector.broadcast %14 : i32 to vector<8x256xi32>
    %18 = arith.xori %17, %16 : vector<8x256xi32>
    %c-2048144777_i32 = arith.constant -2048144777 : i32
    %19 = vector.broadcast %c-2048144777_i32 : i32 to vector<8x256xi32>
    %20 = arith.muli %13, %19 : vector<8x256xi32>
    %21 = arith.xori %18, %20 : vector<8x256xi32>
    %c16_i32 = arith.constant 16 : i32
    %22 = vector.broadcast %c16_i32 : i32 to vector<8x256xi32>
    %23 = arith.shrui %21, %22 : vector<8x256xi32>
    %24 = arith.xori %21, %23 : vector<8x256xi32>
    %c2146121005_i32 = arith.constant 2146121005 : i32
    %25 = vector.broadcast %c2146121005_i32 : i32 to vector<8x256xi32>
    %26 = arith.muli %24, %25 : vector<8x256xi32>
    %c15_i32 = arith.constant 15 : i32
    %27 = vector.broadcast %c15_i32 : i32 to vector<8x256xi32>
    %28 = arith.shrui %26, %27 : vector<8x256xi32>
    %29 = arith.xori %26, %28 : vector<8x256xi32>
    %c-2073254261_i32 = arith.constant -2073254261 : i32
    %30 = vector.broadcast %c-2073254261_i32 : i32 to vector<8x256xi32>
    %31 = arith.muli %29, %30 : vector<8x256xi32>
    %c16_i32_7 = arith.constant 16 : i32
    %32 = vector.broadcast %c16_i32_7 : i32 to vector<8x256xi32>
    %33 = arith.shrui %31, %32 : vector<8x256xi32>
    %34 = arith.xori %31, %33 : vector<8x256xi32>
    %c-429496730_i32 = arith.constant -429496730 : i32
    %35 = vector.broadcast %c-429496730_i32 : i32 to vector<8x256xi32>
    %36 = arith.cmpi ult, %34, %35 : vector<8x256xi32>
    %cst_8 = arith.constant 1.11111116 : f32
    %37 = vector.broadcast %cst_8 : f32 to vector<8x256xf32>
    %38 = arith.mulf %9, %37 : vector<8x256xf32>
    %cst_9 = arith.constant 0.000000e+00 : f32
    %39 = vector.broadcast %cst_9 : f32 to vector<8x256xf32>
    %40 = arith.select %36, %38, %39 : vector<8x256xi1>, vector<8x256xf32>
    %41 = arith.truncf %40 : vector<8x256xf32> to vector<8x256xbf16>
    %c0_10 = arith.constant 0 : index
    %c0_11 = arith.constant 0 : index
    %42 = vector.load %arg5[%c0_10, %c0_11] : memref<256x128xbf16, #tpu.memory_space<vmem>>, vector<256x128xbf16>
    %cst_12 = arith.constant dense<0.000000e+00> : vector<8x128xf32>
    %43 = tpu.matmul %41, %42, %cst_12 {dimension_numbers = #tpu.dot_dimension_numbers<[1], [0], [0], [1], [0, 0, 1, 1], [], []>} : vector<8x256xbf16>, vector<256x128xbf16>, vector<8x128xf32> -> vector<8x128xf32>
    %c0_13 = arith.constant 0 : index
    %c0_14 = arith.constant 0 : index
    %44 = vector.load %arg6[%c0_13, %c0_14] : memref<1x128xf32, #tpu.memory_space<vmem>>, vector<1x128xf32>
    %45 = vector.broadcast %44 : vector<1x128xf32> to vector<8x128xf32>
    %46 = arith.addf %43, %45 : vector<8x128xf32>
    %cst_15 = arith.constant 0.000000e+00 : f32
    %47 = vector.broadcast %cst_15 : f32 to vector<8x128xf32>
    %48 = arith.maximumf %46, %47 : vector<8x128xf32>
    %49 = tpu.iota {dimensions = array<i32: 0>} : vector<8x128xi32>
    %50 = vector.broadcast %1 : i32 to vector<8x128xi32>
    %51 = arith.addi %49, %50 : vector<8x128xi32>
    %52 = tpu.iota {dimensions = array<i32: 1>} : vector<8x128xi32>
    %c195939070_i32 = arith.constant 195939070 : i32
    %53 = arith.addi %0, %c195939070_i32 : i32
    %c-1640531535_i32_16 = arith.constant -1640531535 : i32
    %54 = vector.broadcast %c-1640531535_i32_16 : i32 to vector<8x128xi32>
    %55 = arith.muli %51, %54 : vector<8x128xi32>
    %56 = vector.broadcast %53 : i32 to vector<8x128xi32>
    %57 = arith.xori %56, %55 : vector<8x128xi32>
    %c-2048144777_i32_17 = arith.constant -2048144777 : i32
    %58 = vector.broadcast %c-2048144777_i32_17 : i32 to vector<8x128xi32>
    %59 = arith.muli %52, %58 : vector<8x128xi32>
    %60 = arith.xori %57, %59 : vector<8x128xi32>
    %c16_i32_18 = arith.constant 16 : i32
    %61 = vector.broadcast %c16_i32_18 : i32 to vector<8x128xi32>
    %62 = arith.shrui %60, %61 : vector<8x128xi32>
    %63 = arith.xori %60, %62 : vector<8x128xi32>
    %c2146121005_i32_19 = arith.constant 2146121005 : i32
    %64 = vector.broadcast %c2146121005_i32_19 : i32 to vector<8x128xi32>
    %65 = arith.muli %63, %64 : vector<8x128xi32>
    %c15_i32_20 = arith.constant 15 : i32
    %66 = vector.broadcast %c15_i32_20 : i32 to vector<8x128xi32>
    %67 = arith.shrui %65, %66 : vector<8x128xi32>
    %68 = arith.xori %65, %67 : vector<8x128xi32>
    %c-2073254261_i32_21 = arith.constant -2073254261 : i32
    %69 = vector.broadcast %c-2073254261_i32_21 : i32 to vector<8x128xi32>
    %70 = arith.muli %68, %69 : vector<8x128xi32>
    %c16_i32_22 = arith.constant 16 : i32
    %71 = vector.broadcast %c16_i32_22 : i32 to vector<8x128xi32>
    %72 = arith.shrui %70, %71 : vector<8x128xi32>
    %73 = arith.xori %70, %72 : vector<8x128xi32>
    %c-429496730_i32_23 = arith.constant -429496730 : i32
    %74 = vector.broadcast %c-429496730_i32_23 : i32 to vector<8x128xi32>
    %75 = arith.cmpi ult, %73, %74 : vector<8x128xi32>
    %cst_24 = arith.constant 1.11111116 : f32
    %76 = vector.broadcast %cst_24 : f32 to vector<8x128xf32>
    %77 = arith.mulf %48, %76 : vector<8x128xf32>
    %cst_25 = arith.constant 0.000000e+00 : f32
    %78 = vector.broadcast %cst_25 : f32 to vector<8x128xf32>
    %79 = arith.select %75, %77, %78 : vector<8x128xi1>, vector<8x128xf32>
    %80 = arith.truncf %79 : vector<8x128xf32> to vector<8x128xbf16>
    %c0_26 = arith.constant 0 : index
    %c0_27 = arith.constant 0 : index
    %81 = vector.load %arg7[%c0_26, %c0_27] : memref<128x128xbf16, #tpu.memory_space<vmem>>, vector<128x128xbf16>
    %cst_28 = arith.constant dense<0.000000e+00> : vector<8x128xf32>
    %82 = tpu.matmul %80, %81, %cst_28 {dimension_numbers = #tpu.dot_dimension_numbers<[1], [0], [0], [1], [0, 0, 1, 1], [], []>} : vector<8x128xbf16>, vector<128x128xbf16>, vector<8x128xf32> -> vector<8x128xf32>
    %c0_29 = arith.constant 0 : index
    %c0_30 = arith.constant 0 : index
    %83 = vector.load %arg8[%c0_29, %c0_30] : memref<1x128xf32, #tpu.memory_space<vmem>>, vector<1x128xf32>
    %84 = vector.broadcast %83 : vector<1x128xf32> to vector<8x128xf32>
    %85 = arith.addf %82, %84 : vector<8x128xf32>
    %c0_31 = arith.constant 0 : index
    %c0_32 = arith.constant 0 : index
    %86 = vector.load %arg9[%c0_31, %c0_32] : memref<8x128xf32, #tpu.memory_space<vmem>>, vector<8x128xf32>
    tpu.vector_store %arg9[%c0_31, %c0_32], %85 {strides = array<i32>} : memref<8x128xf32, #tpu.memory_space<vmem>>, vector<8x128xf32>,
    return
  }
  func.func @transform_0(%arg0: i32, %arg1: memref<1xi32, #tpu.memory_space<smem>>) -> (i32, i32) {
    %c0_i32 = arith.constant 0 : i32
    %c0_i32_0 = arith.constant 0 : i32
    return %arg0, %c0_i32 : i32, i32
  }
  func.func @transform_1(%arg0: i32, %arg1: memref<1xi32, #tpu.memory_space<smem>>) -> (i32, i32) {
    %c0_i32 = arith.constant 0 : i32
    %c0_i32_0 = arith.constant 0 : i32
    %c0_i32_1 = arith.constant 0 : i32
    return %c0_i32, %c0_i32_0 : i32, i32
  }
  func.func @transform_2(%arg0: i32, %arg1: memref<1xi32, #tpu.memory_space<smem>>) -> (i32, i32) {
    %c0_i32 = arith.constant 0 : i32
    %c0_i32_0 = arith.constant 0 : i32
    %c0_i32_1 = arith.constant 0 : i32
    return %c0_i32, %c0_i32_0 : i32, i32
  }
  func.func @transform_3(%arg0: i32, %arg1: memref<1xi32, #tpu.memory_space<smem>>) -> (i32, i32) {
    %c0_i32 = arith.constant 0 : i32
    %c0_i32_0 = arith.constant 0 : i32
    %c0_i32_1 = arith.constant 0 : i32
    return %c0_i32, %c0_i32_0 : i32, i32
  }
  func.func @transform_4(%arg0: i32, %arg1: memref<1xi32, #tpu.memory_space<smem>>) -> (i32, i32) {
    %c0_i32 = arith.constant 0 : i32
    %c0_i32_0 = arith.constant 0 : i32
    %c0_i32_1 = arith.constant 0 : i32
    return %c0_i32, %c0_i32_0 : i32, i32
  }
  func.func @transform_5(%arg0: i32, %arg1: memref<1xi32, #tpu.memory_space<smem>>) -> (i32, i32) {
    %c0_i32 = arith.constant 0 : i32
    %c0_i32_0 = arith.constant 0 : i32
    %c0_i32_1 = arith.constant 0 : i32
    return %c0_i32, %c0_i32_0 : i32, i32
  }
  func.func @transform_6(%arg0: i32, %arg1: memref<1xi32, #tpu.memory_space<smem>>) -> (i32, i32) {
    %c0_i32 = arith.constant 0 : i32
    %c0_i32_0 = arith.constant 0 : i32
    %c0_i32_1 = arith.constant 0 : i32
    return %c0_i32, %c0_i32_0 : i32, i32
  }
  func.func @transform_7(%arg0: i32, %arg1: memref<1xi32, #tpu.memory_space<smem>>) -> (i32, i32) {
    %c0_i32 = arith.constant 0 : i32
    %c0_i32_0 = arith.constant 0 : i32
    return %arg0, %c0_i32 : i32, i32
  }
}

</mosaic_0001>

<llo_original>
// kernel: tpu_custom_call.1
$region0: #{tpu_custom_call.1}
  #allocation0 [shape = 'u32[]', space=smem, size = 0x4, offset = 0x4, fixed_abs, tag = 'smem constant byte address 0x4 - core index']
  #allocation1 [shape = 'u32[144,128]{1,0:T(1,128)}', space=vmem, size = 0x12000, scoped, tag = 'internal scratch']
  #allocation2 [shape = 's32[1]{0}', space=sflag, size = 0x4, scoped, tag = 'scoped memory for tpu_custom_call.1']
  #allocation3 [shape = 's32[1]{0:T(128)S(6)}', space=smem, size = 0x200, scoped, tag = 'prefetched SMEM operand 0']
  %s0 = inlined_call_operand.<no memory space> [shape: s32[1], index: 0, kind: input, shape index: {}]
  %s1 = inlined_call_operand.hbm [shape: bf16[8,128], index: 1, kind: input, shape index: {}]
  %s2 = inlined_call_operand.hbm [shape: bf16[128,256], index: 2, kind: input, shape index: {}]
  %s3 = inlined_call_operand.vmem [shape: f32[1,256], index: 3, kind: input, shape index: {}]
  %s4 = inlined_call_operand.hbm [shape: bf16[256,128], index: 4, kind: input, shape index: {}]
  %s5 = inlined_call_operand.vmem [shape: f32[1,128], index: 5, kind: input, shape index: {}]
  %s6 = inlined_call_operand.hbm [shape: bf16[128,128], index: 6, kind: input, shape index: {}]
  %s7 = inlined_call_operand.vmem [shape: f32[1,128], index: 7, kind: input, shape index: {}]
  %s8 = inlined_call_operand.hbm [shape: f32[8,128], index: 8, kind: output, shape index: {}]
  %s9 = sld [smem:[#allocation0]]
  $region54: #{tpu_custom_call.1} parent=0
    _
  %s11 = ssub.s32 1, %s9
  %s12 = scalar_select 0, %s11, %s9
  %13 = sst [smem:[#allocation3]] %s0
  $region1: #{tpu_custom_call.1} parent=0
    #allocation4 [shape = 'u8[2048]{0}', space=vmem, size = 0x800, scoped, tag = 'input window, operand 1, single buffered']
    #allocation5 [shape = 's32[1]{0}', space=sflag, size = 0x4, scoped, tag = 'scoped memory for tpu_custom_call.1']
    #allocation6 [shape = 's32[1]{0}', space=sflag, size = 0x4, scoped, tag = 'scoped memory for tpu_custom_call.1']
    #allocation7 [shape = 'u8[65536]{0}', space=vmem, size = 0x10000, scoped, tag = 'input window, operand 2, single buffered']
    #allocation8 [shape = 's32[1]{0}', space=sflag, size = 0x4, scoped, tag = 'scoped memory for tpu_custom_call.1']
    #allocation9 [shape = 'u8[65536]{0}', space=vmem, size = 0x10000, scoped, tag = 'input window, operand 4, single buffered']
    #allocation10 [shape = 'u8[32768]{0}', space=vmem, size = 0x8000, scoped, tag = 'input window, operand 6, single buffered']
    #allocation11 [shape = 's32[1]{0}', space=sflag, size = 0x4, scoped, tag = 'scoped memory for tpu_custom_call.1']
    #allocation12 [shape = 'u8[4096]{0}', space=vmem, size = 0x1000, scoped, tag = 'output window, operand 0, single buffered']
    %14 = vsyncpa [#allocation5], 0
    %15 = vsyncpa [#allocation8], 0
    %16 = vsyncpa [#allocation11], 0
    %17 = vsyncpa [#allocation6], 0
    // Predicated region
    $region2: #{tpu_custom_call.1} parent=1 // pred_check
      _
    $region3: #{tpu_custom_call.1} parent=1 // pred_check_branch
      %19 = sbr.rel (0) target = $region5
    $region4: #{tpu_custom_call.1} parent=1 // pred_region
      %s21 = ssub.s32 64, 64
      %22 = vsyncadd [#allocation5], %s21
      %s24 = sshll.u32 [#allocation4], 4
      %s25 = int_to_ptr.vmem [resolvable:$true] %s24
      %27 = dma.hbm_to_vmem [thread:$0]  %s1, 64, %s25, [#allocation5]
    $region5: #{tpu_custom_call.1} parent=1 // pred_fallthru
      _
    // Predicated region
    $region6: #{tpu_custom_call.1} parent=1 // pred_check
      _
    $region7: #{tpu_custom_call.1} parent=1 // pred_check_branch
      %29 = sbr.rel (0) target = $region9
    $region8: #{tpu_custom_call.1} parent=1 // pred_region
      %s31 = ssub.s32 2048, 2048
      %32 = vsyncadd [#allocation8], %s31
      %s33 = sshll.u32 [#allocation7], 4
      %s34 = int_to_ptr.vmem [resolvable:$true] %s33
      %39 = dma.hbm_to_vmem [thread:$0]  %s2, 2048, %s34, [#allocation8], 128, 128, 8
    $region9: #{tpu_custom_call.1} parent=1 // pred_fallthru
      _
    // Predicated region
    $region10: #{tpu_custom_call.1} parent=1 // pred_check
      _
    $region11: #{tpu_custom_call.1} parent=1 // pred_check_branch
      %41 = sbr.rel (0) target = $region13
    $region12: #{tpu_custom_call.1} parent=1 // pred_region
      _
    $region13: #{tpu_custom_call.1} parent=1 // pred_fallthru
      _
    // Predicated region
    $region14: #{tpu_custom_call.1} parent=1 // pred_check
      _
    $region15: #{tpu_custom_call.1} parent=1 // pred_check_branch
      %43 = sbr.rel (0) target = $region17
    $region16: #{tpu_custom_call.1} parent=1 // pred_region
      %s45 = ssub.s32 2048, 2048
      %46 = vsyncadd [#allocation8], %s45
      %s47 = sshll.u32 [#allocation9], 4
      %s48 = int_to_ptr.vmem [resolvable:$true] %s47
      %53 = dma.hbm_to_vmem [thread:$0]  %s4, 2048, %s48, [#allocation8], 64, 64, 4
    $region17: #{tpu_custom_call.1} parent=1 // pred_fallthru
      _
    // Predicated region
    $region18: #{tpu_custom_call.1} parent=1 // pred_check
      _
    $region19: #{tpu_custom_call.1} parent=1 // pred_check_branch
      %55 = sbr.rel (0) target = $region21
    $region20: #{tpu_custom_call.1} parent=1 // pred_region
      _
    $region21: #{tpu_custom_call.1} parent=1 // pred_fallthru
      _
    // Predicated region
    $region22: #{tpu_custom_call.1} parent=1 // pred_check
      _
    $region23: #{tpu_custom_call.1} parent=1 // pred_check_branch
      %57 = sbr.rel (0) target = $region25
    $region24: #{tpu_custom_call.1} parent=1 // pred_region
      %s59 = ssub.s32 1024, 1024
      %60 = vsyncadd [#allocation11], %s59
      %s61 = sshll.u32 [#allocation10], 4
      %s62 = int_to_ptr.vmem [resolvable:$true] %s61
      %67 = dma.hbm_to_vmem [thread:$0]  %s6, 1024, %s62, [#allocation11], 64, 64, 4
    $region25: #{tpu_custom_call.1} parent=1 // pred_fallthru
      _
    // Predicated region
    $region26: #{tpu_custom_call.1} parent=1 // pred_check
      _
    $region27: #{tpu_custom_call.1} parent=1 // pred_check_branch
      %69 = sbr.rel (0) target = $region29
    $region28: #{tpu_custom_call.1} parent=1 // pred_region
      _
    $region29: #{tpu_custom_call.1} parent=1 // pred_fallthru
      _
    // Predicated region
    $region30: #{tpu_custom_call.1} parent=1 // pred_check
      _
    $region31: #{tpu_custom_call.1} parent=1 // pred_check_branch
      %71 = sbr.rel (0) target = $region33
    $region32: #{tpu_custom_call.1} parent=1 // pred_region
      %72 = dma.done [#allocation5], 64
    $region33: #{tpu_custom_call.1} parent=1 // pred_fallthru
      _
    // Predicated region
    $region34: #{tpu_custom_call.1} parent=1 // pred_check
      _
    $region35: #{tpu_custom_call.1} parent=1 // pred_check_branch
      %74 = sbr.rel (0) target = $region37
    $region36: #{tpu_custom_call.1} parent=1 // pred_region
      %75 = dma.done [#allocation8], 2048
    $region37: #{tpu_custom_call.1} parent=1 // pred_fallthru
      _
    // Predicated region
    $region38: #{tpu_custom_call.1} parent=1 // pred_check
      _
    $region39: #{tpu_custom_call.1} parent=1 // pred_check_branch
      %77 = sbr.rel (0) target = $region41
    $region40: #{tpu_custom_call.1} parent=1 // pred_region
      %78 = dma.done [#allocation8], 2048
    $region41: #{tpu_custom_call.1} parent=1 // pred_fallthru
      _
    // Predicated region
    $region42: #{tpu_custom_call.1} parent=1 // pred_check
      _
    $region43: #{tpu_custom_call.1} parent=1 // pred_check_branch
      %80 = sbr.rel (0) target = $region45
    $region44: #{tpu_custom_call.1} parent=1 // pred_region
      %81 = dma.done [#allocation11], 1024
    $region45: #{tpu_custom_call.1} parent=1 // pred_fallthru
      _
    %s83 = sld [smem:[#allocation3]]
    %s84 = smul.u32 0, 8
    %v85 = vld [vmem:[#allocation4] sm:$0xf]
    %v86 = vld [vmem:[#allocation7] sm:$0xff]
    %v87 = vld [vmem:[#allocation7 + $0x8] sm:$0xff]
    %v88 = vld [vmem:[#allocation7 + $0x10] sm:$0xff]
    %v89 = vld [vmem:[#allocation7 + $0x18] sm:$0xff]
    %v90 = vld [vmem:[#allocation7 + $0x20] sm:$0xff]
    %v91 = vld [vmem:[#allocation7 + $0x28] sm:$0xff]
    %v92 = vld [vmem:[#allocation7 + $0x30] sm:$0xff]
    %v93 = vld [vmem:[#allocation7 + $0x38] sm:$0xff]
    %v94 = vld [vmem:[#allocation7 + $0x40] sm:$0xff]
    %v95 = vld [vmem:[#allocation7 + $0x48] sm:$0xff]
    %v96 = vld [vmem:[#allocation7 + $0x50] sm:$0xff]
    %v97 = vld [vmem:[#allocation7 + $0x58] sm:$0xff]
    %v98 = vld [vmem:[#allocation7 + $0x60] sm:$0xff]
    %v99 = vld [vmem:[#allocation7 + $0x68] sm:$0xff]
    %v100 = vld [vmem:[#allocation7 + $0x70] sm:$0xff]
    %v101 = vld [vmem:[#allocation7 + $0x78] sm:$0xff]
    %v102 = vld [vmem:[%s3] sm:$0x3]
    %v104 = vlaneseq
    %v105 = vshrl.u32 %v104, 7
    %v106 = vsub.s32 0, %v105
    %v107 = vrot.slane %v102, %v106
    %v108 = vlaneseq
    %v109 = vshrl.u32 %v108, 7
    %v110 = vsub.s32 1, %v109
    %v111 = vrot.slane %v102, %v110
    %v130 = vunpack.c.l.b16 %v86
    %v131 = vunpack.c.h.b16 %v86
    %v132 = vunpack.c.l.b16 %v87
    %v133 = vunpack.c.h.b16 %v87
    %v134 = vunpack.c.l.b16 %v88
    %v135 = vunpack.c.h.b16 %v88
    %v136 = vunpack.c.l.b16 %v89
    %v137 = vunpack.c.h.b16 %v89
    %v138 = vunpack.c.l.b16 %v90
    %v139 = vunpack.c.h.b16 %v90
    %v140 = vunpack.c.l.b16 %v91
    %v141 = vunpack.c.h.b16 %v91
    %v142 = vunpack.c.l.b16 %v92
    %v143 = vunpack.c.h.b16 %v92
    %v144 = vunpack.c.l.b16 %v93
    %v145 = vunpack.c.h.b16 %v93
    %v146 = vunpack.c.l.b16 %v94
    %v147 = vunpack.c.h.b16 %v94
    %v148 = vunpack.c.l.b16 %v95
    %v149 = vunpack.c.h.b16 %v95
    %v150 = vunpack.c.l.b16 %v96
    %v151 = vunpack.c.h.b16 %v96
    %v152 = vunpack.c.l.b16 %v97
    %v153 = vunpack.c.h.b16 %v97
    %v154 = vunpack.c.l.b16 %v98
    %v155 = vunpack.c.h.b16 %v98
    %v156 = vunpack.c.l.b16 %v99
    %v157 = vunpack.c.h.b16 %v99
    %v158 = vunpack.c.l.b16 %v100
    %v159 = vunpack.c.h.b16 %v100
    %v160 = vunpack.c.l.b16 %v101
    %v161 = vunpack.c.h.b16 %v101
    %v162 = vpack.c.b16 %v132, %v130
    %v163 = vpack.c.b16 %v133, %v131
    %v164 = vpack.c.b16 %v136, %v134
    %v165 = vpack.c.b16 %v137, %v135
    %v166 = vpack.c.b16 %v140, %v138
    %v167 = vpack.c.b16 %v141, %v139
    %v168 = vpack.c.b16 %v144, %v142
    %v169 = vpack.c.b16 %v145, %v143
    %v170 = vpack.c.b16 %v148, %v146
    %v171 = vpack.c.b16 %v149, %v147
    %v172 = vpack.c.b16 %v152, %v150
    %v173 = vpack.c.b16 %v153, %v151
    %v174 = vpack.c.b16 %v156, %v154
    %v175 = vpack.c.b16 %v157, %v155
    %v176 = vpack.c.b16 %v160, %v158
    %v177 = vpack.c.b16 %v161, %v159
    %194 = vmatprep.subr.bf16.mxu0 %v163
    %195 = vmatpush1.bf16.msra.mxu0 %v162
    %196 = vmatprep.subr.bf16.mxu0 %v165
    %197 = vmatpush1.bf16.msra.mxu0 %v164
    %198 = vmatprep.subr.bf16.mxu0 %v167
    %199 = vmatpush1.bf16.msra.mxu0 %v166
    %200 = vmatprep.subr.bf16.mxu0 %v169
    %201 = vmatpush1.bf16.msra.mxu0 %v168
    %202 = vmatprep.subr.bf16.mxu0 %v171
    %203 = vmatpush1.bf16.msra.mxu0 %v170
    %204 = vmatprep.subr.bf16.mxu0 %v173
    %205 = vmatpush1.bf16.msra.mxu0 %v172
    %206 = vmatprep.subr.bf16.mxu0 %v175
    %207 = vmatpush1.bf16.msra.mxu0 %v174
    %208 = vmatprep.subr.bf16.mxu0 %v177
    %209 = vmatpush1.bf16.msra.mxu0 %v176
    %210 = vmatprep.subr.bf16.mxu0 0
    %211 = vmatpush1.bf16.msra.mxu0 0
    %212 = vmatprep.subr.bf16.mxu0 0
    %213 = vmatpush1.bf16.msra.mxu0 0
    %214 = vmatprep.subr.bf16.mxu0 0
    %215 = vmatpush1.bf16.msra.mxu0 0
    %216 = vmatprep.subr.bf16.mxu0 0
    %217 = vmatpush1.bf16.msra.mxu0 0
    %218 = vmatprep.subr.bf16.mxu0 0
    %219 = vmatpush1.bf16.msra.mxu0 0
    %220 = vmatprep.subr.bf16.mxu0 0
    %221 = vmatpush1.bf16.msra.mxu0 0
    %222 = vmatprep.subr.bf16.mxu0 0
    %223 = vmatpush1.bf16.msra.mxu0 0
    %224 = vmatprep.subr.bf16.mxu0 0
    %225 = vmatpush1.bf16.msra.mxu0 0
    %226 = vmatprep.mubr.bf16.mxu0 0
    %227 = vmatmul.mubr.bf16.gmra.mrb[0].mxu0 %v85
    %v228 = vpop.f32.mrb[0].mxu0
    %v229 = vadd.f32 %v107, %v228
    %v230 = vpop.f32.mrb[0].mxu0
    %v231 = vadd.f32 %v111, %v230
    %v232 = vpop.f32.mrb[0].mxu0
    %v233 = vpop.f32.mrb[0].mxu0
    %234 = vdwg.mxu0
    %v235 = vmax.f32 %v229, 0.0
    %v236 = vmax.f32 %v231, 0.0
    %v237 = vlaneseq
    %v238 = vshrl.u32 %v237, 7
    %v239 = vstv %s84
    %v240 = vadd.s32 %v238, %v239
    %v241 = vlaneseq
    %v242 = vand.u32 %v241, 127
    %v243 = vadd.s32 %v242, 128
    %s244 = sadd.s32 %s83, 305419896
    %v245 = vmul.u32 %v240, 2654435761
    %v246 = vstv %s244
    %v247 = vxor.u32 %v246, %v245
    %v248 = vmul.u32 %v242, 2246822519
    %v249 = vmul.u32 %v243, 2246822519
    %v250 = vxor.u32 %v247, %v248
    %v251 = vxor.u32 %v247, %v249
    %v252 = vshrl.u32 %v250, 16
    %v253 = vshrl.u32 %v251, 16
    %v254 = vxor.u32 %v250, %v252
    %v255 = vxor.u32 %v251, %v253
    %v256 = vmul.u32 %v254, 2146121005
    %v257 = vmul.u32 %v255, 2146121005
    %v258 = vshrl.u32 %v256, 15
    %v259 = vshrl.u32 %v257, 15
    %v260 = vxor.u32 %v256, %v258
    %v261 = vxor.u32 %v257, %v259
    %v262 = vmul.u32 %v260, 2221713035
    %v263 = vmul.u32 %v261, 2221713035
    %v264 = vshrl.u32 %v262, 16
    %v265 = vshrl.u32 %v263, 16
    %v266 = vxor.u32 %v262, %v264
    %v267 = vxor.u32 %v263, %v265
    %vm268 = vcmp.lt.u32.totalorder %v266, 3865470566
    %vm269 = vcmp.lt.u32.totalorder %v267, 3865470566
    %v270 = vmul.f32 %v235, 1.1111112
    %v271 = vmul.f32 %v236, 1.1111112
    %v272 = vsel %vm268, %v270, 0.0
    %v273 = vsel %vm269, %v271, 0.0
    %v274 = vpack.c.bf16 %v272, %v272
    %v275 = vpack.c.bf16 %v273, %v273
    %v276 = vld [vmem:[#allocation9] sm:$0xf]
    %v277 = vld [vmem:[#allocation9 + $0x4] sm:$0xf]
    %v278 = vld [vmem:[#allocation9 + $0x8] sm:$0xf]
    %v279 = vld [vmem:[#allocation9 + $0xc] sm:$0xf]
    %v280 = vld [vmem:[#allocation9 + $0x10] sm:$0xf]
    %v281 = vld [vmem:[#allocation9 + $0x14] sm:$0xf]
    %v282 = vld [vmem:[#allocation9 + $0x18] sm:$0xf]
    %v283 = vld [vmem:[#allocation9 + $0x1c] sm:$0xf]
    %v284 = vld [vmem:[#allocation9 + $0x20] sm:$0xf]
    %v285 = vld [vmem:[#allocation9 + $0x24] sm:$0xf]
    %v286 = vld [vmem:[#allocation9 + $0x28] sm:$0xf]
    %v287 = vld [vmem:[#allocation9 + $0x2c] sm:$0xf]
    %v288 = vld [vmem:[#allocation9 + $0x30] sm:$0xf]
    %v289 = vld [vmem:[#allocation9 + $0x34] sm:$0xf]
    %v290 = vld [vmem:[#allocation9 + $0x38] sm:$0xf]
    %v291 = vld [vmem:[#allocation9 + $0x3c] sm:$0xf]
    %v292 = vld [vmem:[#allocation9 + $0x40] sm:$0xf]
    %v293 = vld [vmem:[#allocation9 + $0x44] sm:$0xf]
    %v294 = vld [vmem:[#allocation9 + $0x48] sm:$0xf]
    %v295 = vld [vmem:[#allocation9 + $0x4c] sm:$0xf]
    %v296 = vld [vmem:[#allocation9 + $0x50] sm:$0xf]
    %v297 = vld [vmem:[#allocation9 + $0x54] sm:$0xf]
    %v298 = vld [vmem:[#allocation9 + $0x58] sm:$0xf]
    %v299 = vld [vmem:[#allocation9 + $0x5c] sm:$0xf]
    %v300 = vld [vmem:[#allocation9 + $0x60] sm:$0xf]
    %v301 = vld [vmem:[#allocation9 + $0x64] sm:$0xf]
    %v302 = vld [vmem:[#allocation9 + $0x68] sm:$0xf]
    %v303 = vld [vmem:[#allocation9 + $0x6c] sm:$0xf]
    %v304 = vld [vmem:[#allocation9 + $0x70] sm:$0xf]
    %v305 = vld [vmem:[#allocation9 + $0x74] sm:$0xf]
    %v306 = vld [vmem:[#allocation9 + $0x78] sm:$0xf]
    %v307 = vld [vmem:[#allocation9 + $0x7c] sm:$0xf]
    %v308 = vld [vmem:[%s5] sm:$0x1]
    %v310 = vlaneseq
    %v311 = vshrl.u32 %v310, 7
    %v312 = vsub.s32 0, %v311
    %v313 = vrot.slane %v308, %v312
    %v347 = vunpack.c.l.b16 %v276
    %v348 = vunpack.c.l.b16 %v277
    %v349 = vunpack.c.l.b16 %v278
    %v350 = vunpack.c.l.b16 %v279
    %v351 = vunpack.c.l.b16 %v280
    %v352 = vunpack.c.l.b16 %v281
    %v353 = vunpack.c.l.b16 %v282
    %v354 = vunpack.c.l.b16 %v283
    %v355 = vunpack.c.l.b16 %v284
    %v356 = vunpack.c.l.b16 %v285
    %v357 = vunpack.c.l.b16 %v286
    %v358 = vunpack.c.l.b16 %v287
    %v359 = vunpack.c.l.b16 %v288
    %v360 = vunpack.c.l.b16 %v289
    %v361 = vunpack.c.l.b16 %v290
    %v362 = vunpack.c.l.b16 %v291
    %v363 = vunpack.c.l.b16 %v292
    %v364 = vunpack.c.l.b16 %v293
    %v365 = vunpack.c.l.b16 %v294
    %v366 = vunpack.c.l.b16 %v295
    %v367 = vunpack.c.l.b16 %v296
    %v368 = vunpack.c.l.b16 %v297
    %v369 = vunpack.c.l.b16 %v298
    %v370 = vunpack.c.l.b16 %v299
    %v371 = vunpack.c.l.b16 %v300
    %v372 = vunpack.c.l.b16 %v301
    %v373 = vunpack.c.l.b16 %v302
    %v374 = vunpack.c.l.b16 %v303
    %v375 = vunpack.c.l.b16 %v304
    %v376 = vunpack.c.l.b16 %v305
    %v377 = vunpack.c.l.b16 %v306
    %v378 = vunpack.c.l.b16 %v307
    %v379 = vpack.c.b16 %v348, %v347
    %v380 = vpack.c.b16 %v350, %v349
    %v381 = vpack.c.b16 %v352, %v351
    %v382 = vpack.c.b16 %v354, %v353
    %v383 = vpack.c.b16 %v356, %v355
    %v384 = vpack.c.b16 %v358, %v357
    %v385 = vpack.c.b16 %v360, %v359
    %v386 = vpack.c.b16 %v362, %v361
    %v387 = vpack.c.b16 %v364, %v363
    %v388 = vpack.c.b16 %v366, %v365
    %v389 = vpack.c.b16 %v368, %v367
    %v390 = vpack.c.b16 %v370, %v369
    %v391 = vpack.c.b16 %v372, %v371
    %v392 = vpack.c.b16 %v374, %v373
    %v393 = vpack.c.b16 %v376, %v375
    %v394 = vpack.c.b16 %v378, %v377
    %411 = vmatprep.subr.bf16.mxu0 0
    %412 = vmatpush1.bf16.msra.mxu0 %v379
    %413 = vmatprep.subr.bf16.mxu0 0
    %414 = vmatpush1.bf16.msra.mxu0 %v380
    %415 = vmatprep.subr.bf16.mxu0 0
    %416 = vmatpush1.bf16.msra.mxu0 %v381
    %417 = vmatprep.subr.bf16.mxu0 0
    %418 = vmatpush1.bf16.msra.mxu0 %v382
    %419 = vmatprep.subr.bf16.mxu0 0
    %420 = vmatpush1.bf16.msra.mxu0 %v383
    %421 = vmatprep.subr.bf16.mxu0 0
    %422 = vmatpush1.bf16.msra.mxu0 %v384
    %423 = vmatprep.subr.bf16.mxu0 0
    %424 = vmatpush1.bf16.msra.mxu0 %v385
    %425 = vmatprep.subr.bf16.mxu0 0
    %426 = vmatpush1.bf16.msra.mxu0 %v386
    %427 = vmatprep.subr.bf16.mxu0 0
    %428 = vmatpush1.bf16.msra.mxu0 %v387
    %429 = vmatprep.subr.bf16.mxu0 0
    %430 = vmatpush1.bf16.msra.mxu0 %v388
    %431 = vmatprep.subr.bf16.mxu0 0
    %432 = vmatpush1.bf16.msra.mxu0 %v389
    %433 = vmatprep.subr.bf16.mxu0 0
    %434 = vmatpush1.bf16.msra.mxu0 %v390
    %435 = vmatprep.subr.bf16.mxu0 0
    %436 = vmatpush1.bf16.msra.mxu0 %v391
    %437 = vmatprep.subr.bf16.mxu0 0
    %438 = vmatpush1.bf16.msra.mxu0 %v392
    %439 = vmatprep.subr.bf16.mxu0 0
    %440 = vmatpush1.bf16.msra.mxu0 %v393
    %441 = vmatprep.subr.bf16.mxu0 0
    %442 = vmatpush1.bf16.msra.mxu0 %v394
    %443 = vmatprep.mubr.bf16.mxu0 %v275
    %444 = vmatmul.mubr.bf16.gmra.mrb[0].mxu0 %v274
    %v445 = vpop.f32.mrb[0].mxu0
    %v446 = vadd.f32 %v313, %v445
    %v447 = vpop.f32.mrb[0].mxu0
    %v448 = vpop.f32.mrb[0].mxu0
    %v449 = vpop.f32.mrb[0].mxu0
    %450 = vdwg.mxu0
    %v451 = vmax.f32 %v446, 0.0
    %s452 = sadd.s32 %s83, 195939070
    %v453 = vstv %s452
    %v454 = vxor.u32 %v453, %v245
    %v455 = vxor.u32 %v454, %v248
    %v456 = vshrl.u32 %v455, 16
    %v457 = vxor.u32 %v455, %v456
    %v458 = vmul.u32 %v457, 2146121005
    %v459 = vshrl.u32 %v458, 15
    %v460 = vxor.u32 %v458, %v459
    %v461 = vmul.u32 %v460, 2221713035
    %v462 = vshrl.u32 %v461, 16
    %v463 = vxor.u32 %v461, %v462
    %vm464 = vcmp.lt.u32.totalorder %v463, 3865470566
    %v465 = vmul.f32 %v451, 1.1111112
    %v466 = vsel %vm464, %v465, 0.0
    %v467 = vpack.c.bf16 %v466, %v466
    %v468 = vld [vmem:[#allocation10] sm:$0xf]
    %v469 = vld [vmem:[#allocation10 + $0x4] sm:$0xf]
    %v470 = vld [vmem:[#allocation10 + $0x8] sm:$0xf]
    %v471 = vld [vmem:[#allocation10 + $0xc] sm:$0xf]
    %v472 = vld [vmem:[#allocation10 + $0x10] sm:$0xf]
    %v473 = vld [vmem:[#allocation10 + $0x14] sm:$0xf]
    %v474 = vld [vmem:[#allocation10 + $0x18] sm:$0xf]
    %v475 = vld [vmem:[#allocation10 + $0x1c] sm:$0xf]
    %v476 = vld [vmem:[#allocation10 + $0x20] sm:$0xf]
    %v477 = vld [vmem:[#allocation10 + $0x24] sm:$0xf]
    %v478 = vld [vmem:[#allocation10 + $0x28] sm:$0xf]
    %v479 = vld [vmem:[#allocation10 + $0x2c] sm:$0xf]
    %v480 = vld [vmem:[#allocation10 + $0x30] sm:$0xf]
    %v481 = vld [vmem:[#allocation10 + $0x34] sm:$0xf]
    %v482 = vld [vmem:[#allocation10 + $0x38] sm:$0xf]
    %v483 = vld [vmem:[#allocation10 + $0x3c] sm:$0xf]
    %v484 = vld [vmem:[%s7] sm:$0x1]
    %v486 = vlaneseq
    %v487 = vshrl.u32 %v486, 7
    %v488 = vsub.s32 0, %v487
    %v489 = vrot.slane %v484, %v488
    %v507 = vunpack.c.l.b16 %v468
    %v508 = vunpack.c.l.b16 %v469
    %v509 = vunpack.c.l.b16 %v470
    %v510 = vunpack.c.l.b16 %v471
    %v511 = vunpack.c.l.b16 %v472
    %v512 = vunpack.c.l.b16 %v473
    %v513 = vunpack.c.l.b16 %v474
    %v514 = vunpack.c.l.b16 %v475
    %v515 = vunpack.c.l.b16 %v476
    %v516 = vunpack.c.l.b16 %v477
    %v517 = vunpack.c.l.b16 %v478
    %v518 = vunpack.c.l.b16 %v479
    %v519 = vunpack.c.l.b16 %v480
    %v520 = vunpack.c.l.b16 %v481
    %v521 = vunpack.c.l.b16 %v482
    %v522 = vunpack.c.l.b16 %v483
    %v523 = vpack.c.b16 %v508, %v507
    %v524 = vpack.c.b16 %v510, %v509
    %v525 = vpack.c.b16 %v512, %v511
    %v526 = vpack.c.b16 %v514, %v513
    %v527 = vpack.c.b16 %v516, %v515
    %v528 = vpack.c.b16 %v518, %v517
    %v529 = vpack.c.b16 %v520, %v519
    %v530 = vpack.c.b16 %v522, %v521
    %539 = vmatprep.subr.bf16.mxu0 0
    %540 = vmatpush1.bf16.msra.mxu0 %v523
    %541 = vmatprep.subr.bf16.mxu0 0
    %542 = vmatpush1.bf16.msra.mxu0 %v524
    %543 = vmatprep.subr.bf16.mxu0 0
    %544 = vmatpush1.bf16.msra.mxu0 %v525
    %545 = vmatprep.subr.bf16.mxu0 0
    %546 = vmatpush1.bf16.msra.mxu0 %v526
    %547 = vmatprep.subr.bf16.mxu0 0
    %548 = vmatpush1.bf16.msra.mxu0 %v527
    %549 = vmatprep.subr.bf16.mxu0 0
    %550 = vmatpush1.bf16.msra.mxu0 %v528
    %551 = vmatprep.subr.bf16.mxu0 0
    %552 = vmatpush1.bf16.msra.mxu0 %v529
    %553 = vmatprep.subr.bf16.mxu0 0
    %554 = vmatpush1.bf16.msra.mxu0 %v530
    %555 = vmatprep.subr.bf16.mxu0 0
    %556 = vmatpush1.bf16.msra.mxu0 0
    %557 = vmatprep.subr.bf16.mxu0 0
    %558 = vmatpush1.bf16.msra.mxu0 0
    %559 = vmatprep.subr.bf16.mxu0 0
    %560 = vmatpush1.bf16.msra.mxu0 0
    %561 = vmatprep.subr.bf16.mxu0 0
    %562 = vmatpush1.bf16.msra.mxu0 0
    %563 = vmatprep.subr.bf16.mxu0 0
    %564 = vmatpush1.bf16.msra.mxu0 0
    %565 = vmatprep.subr.bf16.mxu0 0
    %566 = vmatpush1.bf16.msra.mxu0 0
    %567 = vmatprep.subr.bf16.mxu0 0
    %568 = vmatpush1.bf16.msra.mxu0 0
    %569 = vmatprep.subr.bf16.mxu0 0
    %570 = vmatpush1.bf16.msra.mxu0 0
    %571 = vmatprep.mubr.bf16.mxu0 0
    %572 = vmatmul.mubr.bf16.gmra.mrb[0].mxu0 %v467
    %v573 = vpop.f32.mrb[0].mxu0
    %v574 = vadd.f32 %v489, %v573
    %v575 = vpop.f32.mrb[0].mxu0
    %v576 = vpop.f32.mrb[0].mxu0
    %v577 = vpop.f32.mrb[0].mxu0
    %578 = vdwg.mxu0
    %579 = vst [vmem:[#allocation12] sm:$0xff] %v574
    // Predicated region
    $region46: #{tpu_custom_call.1} parent=1 // pred_check
      _
    $region47: #{tpu_custom_call.1} parent=1 // pred_check_branch
      %581 = sbr.rel (0) target = $region49
    $region48: #{tpu_custom_call.1} parent=1 // pred_region
      %s583 = ssub.s32 128, 128
      %584 = vsyncadd [#allocation6], %s583
      %s586 = sshll.u32 [#allocation12], 4
      %s587 = int_to_ptr.vmem [resolvable:$true] %s586
      %589 = dma.vmem_to_hbm [thread:$0]  %s587, 128, %s8, [#allocation6]
    $region49: #{tpu_custom_call.1} parent=1 // pred_fallthru
      _
    // Predicated region
    $region50: #{tpu_custom_call.1} parent=1 // pred_check
      _
    $region51: #{tpu_custom_call.1} parent=1 // pred_check_branch
      %591 = sbr.rel (0) target = $region53
    $region52: #{tpu_custom_call.1} parent=1 // pred_region
      %592 = dma.done [#allocation6], 128
    $region53: #{tpu_custom_call.1} parent=1 // pred_fallthru
      _
    %593 = vsyncpa [#allocation5], 1
    %594 = vsyncpa [#allocation8], 1
    %595 = vsyncpa [#allocation11], 1
    %596 = vsyncpa [#allocation6], 1

</llo_original>
